<compile_context>
chip_gen: v5e
topology: v5e:2x2
jax: 0.10.0
libtpu: 0.0.40
codegen_flags: <defaults>
</compile_context>

<pallas_src>
import functools
import math

import jax
import jax.numpy as jnp
from jax.experimental import pallas as pl
from jax.experimental.pallas import tpu as pltpu

_VMEM_LIMIT_BYTES = 48 * 1024 * 1024   # explicit scoped-VMEM limit, v7x-safe headroom


def _round_up(x, m):
    return ((x + m - 1) // m) * m


def _pad_dim(x, axis, size):
    if x.shape[axis] == size:
        return x
    pad = [(0, 0)] * x.ndim
    pad[axis] = (0, size - x.shape[axis])
    return jnp.pad(x, pad)


# ---------------------------------------------------------------------------
# Tiled linear:  o = x @ w_t + b        (w_t already (d_in, d_out))
# ---------------------------------------------------------------------------
def _linear_kernel(x_ref, w_ref, b_ref, o_ref, acc_ref):
    k = pl.program_id(2)

    @pl.when(k == 0)
    def _():
        acc_ref[...] = jnp.zeros_like(acc_ref)

    # bf16 (or native-dtype) inputs, f32 accumulation on the MXU.
    acc_ref[...] += jnp.dot(x_ref[...], w_ref[...],
                            preferred_element_type=jnp.float32)

    @pl.when(k == pl.num_programs(2) - 1)
    def _():
        o_ref[...] = (acc_ref[...] + b_ref[...].astype(jnp.float32)
                      ).astype(o_ref.dtype)


def pallas_linear(x, w_t, b, *, tm=256, tn=256, tk=512, out_dtype=None):
    """x: (M, K), w_t: (K, N), b: (N,) -> (M, N).

    Operands are zero-padded to tile multiples (exact for a matmul: padded K
    contributes zero, padded rows/cols are sliced off) instead of silently
    falling back to full-dimension tiles.  Defaults fit every generation;
    tm=512 / tk=1024 is a good choice on v6e.
    """
    M, K = x.shape
    K2, N = w_t.shape
    assert K == K2 and b.shape == (N,)
    out_dtype = out_dtype or x.dtype

    tm = min(tm, _round_up(M, 8))
    tn = min(tn, _round_up(N, 128))
    tk = min(tk, _round_up(K, 128))
    Mp, Np, Kp = _round_up(M, tm), _round_up(N, tn), _round_up(K, tk)

    x = _pad_dim(_pad_dim(x, 0, Mp), 1, Kp)
    w_t = _pad_dim(_pad_dim(w_t, 0, Kp), 1, Np)
    b = _pad_dim(b, 0, Np).reshape(1, Np)

    isz = jnp.dtype(x.dtype).itemsize
    cost = pl.CostEstimate(
        flops=2 * M * N * K,
        transcendentals=0,
        bytes_accessed=(M * K + K * N + N + M * N) * isz,
    )
    out = pl.pallas_call(
        _linear_kernel,
        out_shape=jax.ShapeDtypeStruct((Mp, Np), out_dtype),
        grid_spec=pltpu.PrefetchScalarGridSpec(
            num_scalar_prefetch=0,
            grid=(Mp // tm, Np // tn, Kp // tk),
            in_specs=[
                pl.BlockSpec((tm, tk), lambda i, j, k: (i, k)),
                pl.BlockSpec((tk, tn), lambda i, j, k: (k, j)),
                pl.BlockSpec((1, tn), lambda i, j, k: (0, j)),
            ],
            out_specs=pl.BlockSpec((tm, tn), lambda i, j, k: (i, j)),
            scratch_shapes=[pltpu.VMEM((tm, tn), jnp.float32)],
        ),
        compiler_params=pltpu.CompilerParams(
            dimension_semantics=("parallel", "parallel", "arbitrary"),
            vmem_limit_bytes=_VMEM_LIMIT_BYTES),
        cost_estimate=cost,
    )(x, w_t, b)
    if (Mp, Np) != (M, N):
        out = out[:M, :N]
    return out


# ---------------------------------------------------------------------------
# Flash scaled-dot-product attention.
#
# Packed head-major inputs: (B, P, H, S, d_k); the P axis selects Q/K/V via
# the BlockSpec index_map (P=3 on the fused self-attention path, P=1
# otherwise).  Grid = (B, H, Sq tiles, Sk tiles); the Sk axis is a reduction
# ("arbitrary") with online-softmax state in VMEM scratch, so VMEM use is
# O(tq * tsk) regardless of sequence length.  Q is pre-scaled by 1/sqrt(d_k)
# (folded into the projection weights), so the kernel never rescales.
# ---------------------------------------------------------------------------
def _flash_kernel(q_ref, k_ref, v_ref, o_ref, lse_ref, m_sc, l_sc, acc_sc, *,
                  sk_valid, tsk, mask_k):
    ki = pl.program_id(3)

    @pl.when(ki == 0)
    def _():
        m_sc[...] = jnp.full_like(m_sc, -jnp.inf)
        l_sc[...] = jnp.zeros_like(l_sc)
        acc_sc[...] = jnp.zeros_like(acc_sc)

    q = q_ref[0, 0, 0]                                     # (tq, d_k)
    k = k_ref[0, 0, 0]                                     # (tsk, d_k)
    v = v_ref[0, 0, 0]                                     # (tsk, d_k)

    # Contract d_k on both sides (no in-kernel transpose of K).
    s = jax.lax.dot_general(q, k, (((1,), (1,)), ((), ())),
                            preferred_element_type=jnp.float32)   # (tq, tsk)
    if mask_k:   # static flag: only emitted when Sk was padded
        col = ki * tsk + jax.lax.broadcasted_iota(jnp.int32, s.shape, 1)
        s = jnp.where(col < sk_valid, s, -jnp.inf)

    m_prev = m_sc[...]
    m_new = jnp.maximum(m_prev, jnp.max(s, axis=-1, keepdims=True))
    alpha = jnp.exp(m_prev - m_new)
    p = jnp.exp(s - m_new)
    l_sc[...] = alpha * l_sc[...] + jnp.sum(p, axis=-1, keepdims=True)
    acc_sc[...] = alpha * acc_sc[...] + jnp.dot(
        p.astype(v.dtype), v, preferred_element_type=jnp.float32)
    m_sc[...] = m_new

    @pl.when(ki == pl.num_programs(3) - 1)
    def _():
        l = l_sc[...]
        l = jnp.where(l > 0.0, l, 1.0)         # guard padded query rows
        o_ref[0, 0] = (acc_sc[...] / l).astype(o_ref.dtype)   # exact normalize
        lse_ref[0, 0] = m_sc[...] + jnp.log(l)


def _weights_kernel(q_ref, k_ref, lse_ref, w_ref, *, sk_valid, tsk, mask_k):
    # Exact softmax weights from the flash log-sum-exp; fully tiled over Sk.
    q = q_ref[0, 0, 0]
    k = k_ref[0, 0, 0]
    s = jax.lax.dot_general(q, k, (((1,), (1,)), ((), ())),
                            preferred_element_type=jnp.float32)
    if mask_k:
        ki = pl.program_id(3)
        col = ki * tsk + jax.lax.broadcasted_iota(jnp.int32, s.shape, 1)
        s = jnp.where(col < sk_valid, s, -jnp.inf)
    w_ref[0, 0] = jnp.exp(s - lse_ref[0, 0]).astype(w_ref.dtype)


def pallas_attention(q_pack, k_pack, v_pack, slots, *, return_weights=True,
                     out_dtype=None, weights_dtype=None, tq=128, tsk=512):
    q_slot, k_slot, v_slot = slots
    B, _, H, sq, d_k = q_pack.shape
    sk = k_pack.shape[3]
    out_dtype = out_dtype or q_pack.dtype
    weights_dtype = weights_dtype or out_dtype

    # tq on an 8-sublane granule; tsk on a 128-lane granule (it is the last
    # dim of the attention-weights block).  Defaults (128, 512) fit the v7x
    # 64 MiB VMEM budget; v5e/v6e may raise tq to 256.
    tq = min(tq, _round_up(sq, 8))
    tsk = min(tsk, _round_up(sk, 128))

    fused = (q_pack is k_pack) and (k_pack is v_pack)
    if fused:
        # One shared packed array: pad the sequence axis once to a length both
        # tilings divide.
        sp = _round_up(sq, math.lcm(tq, tsk))
        q_pack = k_pack = v_pack = _pad_dim(q_pack, 3, sp)
        sqp = skp = sp
    else:
        sqp, skp = _round_up(sq, tq), _round_up(sk, tsk)
        q_pack = _pad_dim(q_pack, 3, sqp)
        k_pack = _pad_dim(k_pack, 3, skp)
        v_pack = _pad_dim(v_pack, 3, skp)

    mask_k = (skp != sk)
    # Leading three axes are "parallel"; keep B*H*nq even so v7x's 2 TCs split
    # the work cleanly.
    grid = (B, H, sqp // tq, skp // tsk)

    q_spec = pl.BlockSpec((1, 1, 1, tq, d_k),
                          lambda b, h, qi, ki: (b, q_slot, h, qi, 0))
    k_spec = pl.BlockSpec((1, 1, 1, tsk, d_k),
                          lambda b, h, qi, ki: (b, k_slot, h, ki, 0))
    v_spec = pl.BlockSpec((1, 1, 1, tsk, d_k),
                          lambda b, h, qi, ki: (b, v_slot, h, ki, 0))

    isz = jnp.dtype(q_pack.dtype).itemsize
    flash_cost = pl.CostEstimate(
        flops=4 * B * H * sqp * skp * d_k,
        transcendentals=B * H * sqp * skp,
        bytes_accessed=B * H * (2 * sqp * d_k + 2 * skp * d_k) * isz,
    )
    out, lse = pl.pallas_call(
        functools.partial(_flash_kernel, sk_valid=sk, tsk=tsk, mask_k=mask_k),
        out_shape=(jax.ShapeDtypeStruct((B, H, sqp, d_k), out_dtype),
                   jax.ShapeDtypeStruct((B, H, sqp, 1), jnp.float32)),
        grid_spec=pltpu.PrefetchScalarGridSpec(
            num_scalar_prefetch=0,
            grid=grid,
            in_specs=[q_spec, k_spec, v_spec],
            out_specs=(
                pl.BlockSpec((1, 1, tq, d_k), lambda b, h, qi, ki: (b, h, qi, 0)),
                pl.BlockSpec((1, 1, tq, 1), lambda b, h, qi, ki: (b, h, qi, 0)),
            ),
            scratch_shapes=[pltpu.VMEM((tq, 1), jnp.float32),
                            pltpu.VMEM((tq, 1), jnp.float32),
                            pltpu.VMEM((tq, d_k), jnp.float32)],
        ),
        compiler_params=pltpu.CompilerParams(
            dimension_semantics=("parallel", "parallel", "parallel", "arbitrary"),
            vmem_limit_bytes=_VMEM_LIMIT_BYTES),
        cost_estimate=flash_cost,
    )(q_pack, k_pack, v_pack)

    weights = None
    if return_weights:
        # Recomputes Q@K^T against the flash LSE so the returned weights are an
        # exact softmax while staying O(tq*tsk) in VMEM.  The O(Sq*Sk) HBM
        # write dominates this kernel anyway, which is why it is optional.
        w_cost = pl.CostEstimate(
            flops=2 * B * H * sqp * skp * d_k,
            transcendentals=B * H * sqp * skp,
            bytes_accessed=(B * H * (sqp * d_k + skp * d_k) * isz
                            + B * H * sqp * skp
                            * jnp.dtype(weights_dtype).itemsize),
        )
        weights = pl.pallas_call(
            functools.partial(_weights_kernel, sk_valid=sk, tsk=tsk,
                              mask_k=mask_k),
            out_shape=jax.ShapeDtypeStruct((B, H, sqp, skp), weights_dtype),
            grid_spec=pltpu.PrefetchScalarGridSpec(
                num_scalar_prefetch=0,
                grid=grid,
                in_specs=[q_spec, k_spec,
                          pl.BlockSpec((1, 1, tq, 1),
                                       lambda b, h, qi, ki: (b, h, qi, 0))],
                out_specs=pl.BlockSpec((1, 1, tq, tsk),
                                       lambda b, h, qi, ki: (b, h, qi, ki)),
            ),
            compiler_params=pltpu.CompilerParams(
                dimension_semantics=("parallel",) * 4,
                vmem_limit_bytes=_VMEM_LIMIT_BYTES),
            cost_estimate=w_cost,
        )(q_pack, k_pack, lse)
        if (sqp, skp) != (sq, sk):
            weights = weights[:, :, :sq, :sk]

    if sqp != sq:
        out = out[:, :, :sq]
    return out, weights


# ---------------------------------------------------------------------------
# Full MultiHeadAttention forward
# ---------------------------------------------------------------------------
def mha_forward(params, query, key, value, *, return_weights=True):
    # TODO(synk): mask / external kv_cache (None on the reference default path)
    #             are not implemented.
    num_heads = params["num_heads"]
    cdt = params["wq_t"].dtype                    # compute dtype (bf16)
    d_model = params["wq_t"].shape[0]
    d_k = d_model // num_heads
    out_dt = query.dtype

    B, Sq, _ = query.shape
    Sk = key.shape[1]

    qc = query.astype(cdt)

    if (query is key) and (key is value):
        # Self-attention fast path: one fused QKV matmul, then a single
        # head-major repack (also yields the (B, H, S, d_k) kv_cache layout as
        # free slices below).
        qkv = pallas_linear(qc.reshape(B * Sq, d_model),
                            params["wqkv_t"], params["bqkv"])
        pack = qkv.reshape(B, Sq, 3, num_heads, d_k).transpose(0, 2, 3, 1, 4)
        q_pack = k_pack = v_pack = pack                 # (B, 3, H, Sq, d_k)
        slots = (0, 1, 2)
    else:
        kc = key.astype(cdt)
        vc = value.astype(cdt)
        q = pallas_linear(qc.reshape(B * Sq, d_model), params["wq_t"], params["bq"])
        k = pallas_linear(kc.reshape(B * Sk, d_model), params["wk_t"], params["bk"])
        v = pallas_linear(vc.reshape(B * Sk, d_model), params["wv_t"], params["bv"])
        q_pack = q.reshape(B, Sq, 1, num_heads, d_k).transpose(0, 2, 3, 1, 4)
        k_pack = k.reshape(B, Sk, 1, num_heads, d_k).transpose(0, 2, 3, 1, 4)
        v_pack = v.reshape(B, Sk, 1, num_heads, d_k).transpose(0, 2, 3, 1, 4)
        slots = (0, 0, 0)

    # kv_cache in PyTorch's (B, H, Sk, d_k) layout: free slices of the
    # head-major packed arrays (no post-hoc transpose).
    K_cache = k_pack[:, slots[1]].astype(out_dt)
    V_cache = v_pack[:, slots[2]].astype(out_dt)

    attn_heads, attn_weights = pallas_attention(
        q_pack, k_pack, v_pack, slots,
        return_weights=return_weights,
        out_dtype=cdt, weights_dtype=out_dt)          # weights can be bf16 too

    # (B, H, Sq, d_k) -> (B*Sq, d_model) for the lane-dense output projection.
    attn_flat = attn_heads.transpose(0, 2, 1, 3).reshape(B * Sq, d_model)
    out = pallas_linear(attn_flat, params["wo_t"], params["bo"],
                        out_dtype=out_dt).reshape(B, Sq, d_model)

    return out, attn_weights, (K_cache, V_cache)


# ---------------------------------------------------------------------------
# Parameters: PyTorch-style raw weights + kernel-ready prepared params
# ---------------------------------------------------------------------------
def init_raw_params(key, d_model, num_heads):
    """nn.Linear-like init: W, b ~ U(-1/sqrt(fan_in), 1/sqrt(fan_in)), W is (out, in)."""
    del num_heads
    ks = jax.random.split(key, 8)
    bound = 1.0 / (d_model ** 0.5)

    def u(k, shape):
        return jax.random.uniform(k, shape, jnp.float32, -bound, bound)

    return {
        "wq": u(ks[0], (d_model, d_model)), "bq": u(ks[1], (d_model,)),
        "wk": u(ks[2], (d_model, d_model)), "bk": u(ks[3], (d_model,)),
        "wv": u(ks[4], (d_model, d_model)), "bv": u(ks[5], (d_model,)),
        "wo": u(ks[6], (d_model, d_model)), "bo": u(ks[7], (d_model,)),
    }


def prepare_params(raw, num_heads, compute_dtype=jnp.bfloat16):
    """Pre-transpose weights to (in, out), fold 1/sqrt(d_k) into the Q
    projection (weight AND bias), build the fused QKV weight, cast to bf16."""
    d_model = raw["wq"].shape[0]
    d_k = d_model // num_heads
    scale = 1.0 / (d_k ** 0.5)

    wq_t = (raw["wq"] * scale).T
    bq = raw["bq"] * scale
    wk_t, bk = raw["wk"].T, raw["bk"]
    wv_t, bv = raw["wv"].T, raw["bv"]
    wo_t, bo = raw["wo"].T, raw["bo"]

    def c(a):
        return jnp.asarray(a, compute_dtype)

    return {
        "num_heads": num_heads,
        "wq_t": c(wq_t), "bq": c(bq),
        "wk_t": c(wk_t), "bk": c(bk),
        "wv_t": c(wv_t), "bv": c(bv),
        "wo_t": c(wo_t), "bo": c(bo),
        "wqkv_t": c(jnp.concatenate([wq_t, wk_t, wv_t], axis=1)),  # (d, 3d)
        "bqkv": c(jnp.concatenate([bq, bk, bv], axis=0)),
    }


def reference_mha(raw, num_heads, query, key, value):
    """Plain-JAX f32 reference matching the PyTorch module."""
    B, _, d_model = query.shape
    d_k = d_model // num_heads

    def lin(x, w, b):
        return x @ w.T + b

    Q = lin(query, raw["wq"], raw["bq"]).reshape(B, -1, num_heads, d_k).transpose(0, 2, 1, 3)
    K = lin(key, raw["wk"], raw["bk"]).reshape(B, -1, num_heads, d_k).transpose(0, 2, 1, 3)
    V = lin(value, raw["wv"], raw["bv"]).reshape(B, -1, num_heads, d_k).transpose(0, 2, 1, 3)
    s = jnp.einsum("bhqd,bhkd->bhqk", Q, K) / (d_k ** 0.5)
    p = jax.nn.softmax(s, axis=-1)
    o = jnp.einsum("bhqk,bhkd->bhqd", p, V).transpose(0, 2, 1, 3).reshape(B, -1, d_model)
    return lin(o, raw["wo"], raw["bo"]), p, (K, V)


if __name__ == "__main__":
    batch, seq, d_model, num_heads = 2, 8, 32, 4
    d_k = d_model // num_heads

    root = jax.random.PRNGKey(0)
    k_par, k_q, k_k, k_v = jax.random.split(root, 4)

    raw = init_raw_params(k_par, d_model, num_heads)
    params = prepare_params(raw, num_heads, compute_dtype=jnp.bfloat16)

    query = jax.random.normal(k_q, (batch, seq, d_model), jnp.float32)
    key_in = jax.random.normal(k_k, (batch, seq, d_model), jnp.float32)
    value = jax.random.normal(k_v, (batch, seq, d_model), jnp.float32)

    # --- general path: distinct q / k / v -----------------------------------
    out, attn_w, (K, V) = mha_forward(params, query, key_in, value)
    jax.block_until_ready((out, attn_w, K, V))

    assert out.shape == (batch, seq, d_model)
    assert attn_w.shape == (batch, num_heads, seq, seq)
    assert K.shape == (batch, num_heads, seq, d_k)
    assert V.shape == (batch, num_heads, seq, d_k)

    ref_out, ref_w, (ref_K, ref_V) = reference_mha(raw, num_heads, query, key_in, value)
    tol = dict(atol=5e-2, rtol=5e-2)   # loose: bf16 compute vs f32 reference
    assert jnp.allclose(out, ref_out, **tol)
    assert jnp.allclose(attn_w, ref_w, **tol)
    assert jnp.allclose(K, ref_K, **tol)
    assert jnp.allclose(V, ref_V, **tol)
    # exact-softmax weights path: rows sum to ~1
    assert jnp.allclose(jnp.sum(attn_w, axis=-1), 1.0, atol=1e-2)

    # --- self-attention fast path: fused QKV projection ----------------------
    out_sa, w_sa, _ = mha_forward(params, query, query, query)
    jax.block_until_ready((out_sa, w_sa))
    ref_out_sa, ref_w_sa, _ = reference_mha(raw, num_heads, query, query, query)
    assert jnp.allclose(out_sa, ref_out_sa, **tol)
    assert jnp.allclose(w_sa, ref_w_sa, **tol)

    # --- weights output disabled (pure flash path, no O(Sq*Sk) HBM write) ----
    out_nw, w_nw, _ = mha_forward(params, query, key_in, value, return_weights=False)
    jax.block_until_ready(out_nw)
    assert w_nw is None
    assert jnp.allclose(out_nw, out, atol=1e-3, rtol=1e-3)

    print("KERNEL_OK")
</pallas_src>

<mosaic_0001>
module attributes {stable_mosaic.version = 11 : i64} {
  func.func @_linear_kernel(%arg0: i32, %arg1: i32, %arg2: i32, %arg3: memref<16x128xbf16, #tpu.memory_space<vmem>>, %arg4: memref<128x128xbf16, #tpu.memory_space<vmem>>, %arg5: memref<1x128xbf16, #tpu.memory_space<vmem>>, %arg6: memref<16x128xbf16, #tpu.memory_space<vmem>>, %arg7: memref<16x128xf32, #tpu.memory_space<vmem>>) attributes {dimension_semantics = [#tpu.dimension_semantics<parallel>, #tpu.dimension_semantics<parallel>, #tpu.dimension_semantics<arbitrary>], iteration_bounds = array<i64: 1, 1, 1>, scalar_prefetch = 0 : i64, scratch_operands = 1 : i64, tpu.core_type = #tpu.core_type<tc>, window_params = [{transform_indices = @transform_0, window_bounds = array<i64: 16, 128>}, {transform_indices = @transform_1, window_bounds = array<i64: 128, 128>}, {transform_indices = @transform_2, window_bounds = array<i64: 1, 128>}, {transform_indices = @transform_3, window_bounds = array<i64: 16, 128>}]} {
    %c0_i32 = arith.constant 0 : i32
    %0 = arith.cmpi eq, %arg2, %c0_i32 : i32
    %1 = arith.extui %0 : i1 to i32
    %c0_i32_0 = arith.constant 0 : i32
    %2 = arith.cmpi ne, %1, %c0_i32_0 : i32
    scf.if %2 {
      %cst_10 = arith.constant 0.000000e+00 : f32
      %12 = vector.broadcast %cst_10 : f32 to vector<16x128xf32>
      %c0_11 = arith.constant 0 : index
      %c0_12 = arith.constant 0 : index
      %13 = vector.load %arg7[%c0_11, %c0_12] : memref<16x128xf32, #tpu.memory_space<vmem>>, vector<16x128xf32>
      tpu.vector_store %arg7[%c0_11, %c0_12], %12 {strides = array<i32>} : memref<16x128xf32, #tpu.memory_space<vmem>>, vector<16x128xf32>,
    } else {
    }
    %c0 = arith.constant 0 : index
    %c0_1 = arith.constant 0 : index
    %3 = vector.load %arg7[%c0, %c0_1] : memref<16x128xf32, #tpu.memory_space<vmem>>, vector<16x128xf32>
    %c0_2 = arith.constant 0 : index
    %c0_3 = arith.constant 0 : index
    %4 = vector.load %arg3[%c0_2, %c0_3] : memref<16x128xbf16, #tpu.memory_space<vmem>>, vector<16x128xbf16>
    %c0_4 = arith.constant 0 : index
    %c0_5 = arith.constant 0 : index
    %5 = vector.load %arg4[%c0_4, %c0_5] : memref<128x128xbf16, #tpu.memory_space<vmem>>, vector<128x128xbf16>
    %cst = arith.constant dense<0.000000e+00> : vector<16x128xf32>
    %6 = tpu.matmul %4, %5, %cst {dimension_numbers = #tpu.dot_dimension_numbers<[1], [0], [0], [1], [0, 0, 1, 1], [], []>} : vector<16x128xbf16>, vector<128x128xbf16>, vector<16x128xf32> -> vector<16x128xf32>
    %7 = arith.addf %3, %6 : vector<16x128xf32>
    %c0_6 = arith.constant 0 : index
    %c0_7 = arith.constant 0 : index
    %8 = vector.load %arg7[%c0_6, %c0_7] : memref<16x128xf32, #tpu.memory_space<vmem>>, vector<16x128xf32>
    tpu.vector_store %arg7[%c0_6, %c0_7], %7 {strides = array<i32>} : memref<16x128xf32, #tpu.memory_space<vmem>>, vector<16x128xf32>,
    %c0_i32_8 = arith.constant 0 : i32
    %9 = arith.cmpi eq, %arg2, %c0_i32_8 : i32
    %10 = arith.extui %9 : i1 to i32
    %c0_i32_9 = arith.constant 0 : i32
    %11 = arith.cmpi ne, %10, %c0_i32_9 : i32
    scf.if %11 {
      %c0_10 = arith.constant 0 : index
      %c0_11 = arith.constant 0 : index
      %12 = vector.load %arg7[%c0_10, %c0_11] : memref<16x128xf32, #tpu.memory_space<vmem>>, vector<16x128xf32>
      %c0_12 = arith.constant 0 : index
      %c0_13 = arith.constant 0 : index
      %13 = vector.load %arg5[%c0_12, %c0_13] : memref<1x128xbf16, #tpu.memory_space<vmem>>, vector<1x128xbf16>
      %14 = arith.extf %13 : vector<1x128xbf16> to vector<1x128xf32>
      %15 = vector.broadcast %14 : vector<1x128xf32> to vector<16x128xf32>
      %16 = arith.addf %12, %15 : vector<16x128xf32>
      %17 = arith.truncf %16 : vector<16x128xf32> to vector<16x128xbf16>
      %c0_14 = arith.constant 0 : index
      %c0_15 = arith.constant 0 : index
      %18 = vector.load %arg6[%c0_14, %c0_15] : memref<16x128xbf16, #tpu.memory_space<vmem>>, vector<16x128xbf16>
      tpu.vector_store %arg6[%c0_14, %c0_15], %17 {strides = array<i32>} : memref<16x128xbf16, #tpu.memory_space<vmem>>, vector<16x128xbf16>,
    } else {
    }
    return
  }
  func.func @transform_0(%arg0: i32, %arg1: i32, %arg2: i32) -> (i32, i32) {
    %c0_i32 = arith.constant 0 : i32
    return %arg0, %arg2 : i32, i32
  }
  func.func @transform_1(%arg0: i32, %arg1: i32, %arg2: i32) -> (i32, i32) {
    %c0_i32 = arith.constant 0 : i32
    return %arg2, %arg1 : i32, i32
  }
  func.func @transform_2(%arg0: i32, %arg1: i32, %arg2: i32) -> (i32, i32) {
    %c0_i32 = arith.constant 0 : i32
    %c0_i32_0 = arith.constant 0 : i32
    return %c0_i32, %arg1 : i32, i32
  }
  func.func @transform_3(%arg0: i32, %arg1: i32, %arg2: i32) -> (i32, i32) {
    %c0_i32 = arith.constant 0 : i32
    return %arg0, %arg1 : i32, i32
  }
}

</mosaic_0001>

<llo_original>
// kernel: tpu_custom_call.1
$region0: #{tpu_custom_call.1}
  #allocation0 [shape = 'u32[]', space=smem, size = 0x4, offset = 0x4, fixed_abs, tag = 'smem constant byte address 0x4 - core index']
  #allocation1 [shape = 'u32[72,128]{1,0:T(1,128)}', space=vmem, size = 0x9000, scoped, tag = 'internal scratch']
  #allocation2 [shape = 'f32[16,128]{1,0:T(8,128)}', space=vmem, size = 0x2000, scoped, tag = 'scratch operand']
  %s0 = inlined_call_operand.hbm [shape: bf16[16,128], index: 0, kind: input, shape index: {}]
  %s1 = inlined_call_operand.hbm [shape: bf16[128,128], index: 1, kind: input, shape index: {}]
  %s2 = inlined_call_operand.vmem [shape: bf16[1,128], index: 2, kind: input, shape index: {}]
  %s3 = inlined_call_operand.hbm [shape: bf16[16,128], index: 3, kind: output, shape index: {}]
  %s4 = sld [smem:[#allocation0]]
  $region38: #{tpu_custom_call.1} parent=0
    _
  %s6 = ssub.s32 1, %s4
  %s7 = scalar_select 0, %s6, %s4
  $region1: #{tpu_custom_call.1} parent=0
    #allocation3 [shape = 'u8[4096]{0}', space=vmem, size = 0x1000, scoped, tag = 'input window, operand 0, single buffered']
    #allocation4 [shape = 's32[1]{0}', space=sflag, size = 0x4, scoped, tag = 'scoped memory for tpu_custom_call.1']
    #allocation5 [shape = 's32[1]{0}', space=sflag, size = 0x4, scoped, tag = 'scoped memory for tpu_custom_call.1']
    #allocation6 [shape = 'u8[32768]{0}', space=vmem, size = 0x8000, scoped, tag = 'input window, operand 1, single buffered']
    #allocation7 [shape = 's32[1]{0}', space=sflag, size = 0x4, scoped, tag = 'scoped memory for tpu_custom_call.1']
    #allocation8 [shape = 'u8[4096]{0}', space=vmem, size = 0x1000, scoped, tag = 'output window, operand 0, single buffered']
    %8 = vsyncpa [#allocation4], 0
    %9 = vsyncpa [#allocation7], 0
    %10 = vsyncpa [#allocation5], 0
    // Predicated region
    $region2: #{tpu_custom_call.1} parent=1 // pred_check
      _
    $region3: #{tpu_custom_call.1} parent=1 // pred_check_branch
      %12 = sbr.rel (0) target = $region5
    $region4: #{tpu_custom_call.1} parent=1 // pred_region
      %14 = vsyncadd [#allocation4], 0
      %s15 = sshll.u32 %s0, 4
      %s16 = int_to_ptr.hbm [resolvable:$true] %s15
      %s17 = sshll.u32 [#allocation3], 4
      %s18 = int_to_ptr.vmem [resolvable:$true] %s17
      %23 = dma.hbm_to_vmem [thread:$0]  %s16, 128, %s18, [#allocation4], 64, 64, 4
    $region5: #{tpu_custom_call.1} parent=1 // pred_fallthru
      _
    // Predicated region
    $region6: #{tpu_custom_call.1} parent=1 // pred_check
      _
    $region7: #{tpu_custom_call.1} parent=1 // pred_check_branch
      %25 = sbr.rel (0) target = $region9
    $region8: #{tpu_custom_call.1} parent=1 // pred_region
      %27 = vsyncadd [#allocation7], 0
      %s28 = sshll.u32 %s1, 4
      %s29 = int_to_ptr.hbm [resolvable:$true] %s28
      %s30 = sshll.u32 [#allocation6], 4
      %s31 = int_to_ptr.vmem [resolvable:$true] %s30
      %36 = dma.hbm_to_vmem [thread:$0]  %s29, 1024, %s31, [#allocation7], 64, 64, 4
    $region9: #{tpu_custom_call.1} parent=1 // pred_fallthru
      _
    // Predicated region
    $region10: #{tpu_custom_call.1} parent=1 // pred_check
      _
    $region11: #{tpu_custom_call.1} parent=1 // pred_check_branch
      %38 = sbr.rel (0) target = $region13
    $region12: #{tpu_custom_call.1} parent=1 // pred_region
      _
    $region13: #{tpu_custom_call.1} parent=1 // pred_fallthru
      _
    // Predicated region
    $region14: #{tpu_custom_call.1} parent=1 // pred_check
      _
    $region15: #{tpu_custom_call.1} parent=1 // pred_check_branch
      %40 = sbr.rel (0) target = $region17
    $region16: #{tpu_custom_call.1} parent=1 // pred_region
      %42 = dma.done [#allocation4], 128
    $region17: #{tpu_custom_call.1} parent=1 // pred_fallthru
      _
    // Predicated region
    $region18: #{tpu_custom_call.1} parent=1 // pred_check
      _
    $region19: #{tpu_custom_call.1} parent=1 // pred_check_branch
      %44 = sbr.rel (0) target = $region21
    $region20: #{tpu_custom_call.1} parent=1 // pred_region
      %46 = dma.done [#allocation7], 1024
    $region21: #{tpu_custom_call.1} parent=1 // pred_fallthru
      _
    %p47 = scmp.eq.s32.totalorder 0, 0
    // Predicated region
    $region22: #{tpu_custom_call.1} parent=1 // pred_check
      %p48 = pneg %p47
    $region23: #{tpu_custom_call.1} parent=1 // pred_check_branch
      %50 = sbr.rel (%p48) target = $region25
    $region24: #{tpu_custom_call.1} parent=1 // pred_region
      %51 = vst [vmem:[#allocation2] sm:$0xff] 0.0
      %52 = vst [vmem:[#allocation2 + $0x8] sm:$0xff] 0.0
    $region25: #{tpu_custom_call.1} parent=1 // pred_fallthru
      _
    %v53 = vld [vmem:[#allocation2] sm:$0xff]
    %v54 = vld [vmem:[#allocation2 + $0x8] sm:$0xff]
    %v55 = vld [vmem:[#allocation3] sm:$0xf]
    %v56 = vld [vmem:[#allocation3 + $0x4] sm:$0xf]
    %v57 = vld [vmem:[#allocation6] sm:$0xf]
    %v58 = vld [vmem:[#allocation6 + $0x4] sm:$0xf]
    %v59 = vld [vmem:[#allocation6 + $0x8] sm:$0xf]
    %v60 = vld [vmem:[#allocation6 + $0xc] sm:$0xf]
    %v61 = vld [vmem:[#allocation6 + $0x10] sm:$0xf]
    %v62 = vld [vmem:[#allocation6 + $0x14] sm:$0xf]
    %v63 = vld [vmem:[#allocation6 + $0x18] sm:$0xf]
    %v64 = vld [vmem:[#allocation6 + $0x1c] sm:$0xf]
    %v65 = vld [vmem:[#allocation6 + $0x20] sm:$0xf]
    %v66 = vld [vmem:[#allocation6 + $0x24] sm:$0xf]
    %v67 = vld [vmem:[#allocation6 + $0x28] sm:$0xf]
    %v68 = vld [vmem:[#allocation6 + $0x2c] sm:$0xf]
    %v69 = vld [vmem:[#allocation6 + $0x30] sm:$0xf]
    %v70 = vld [vmem:[#allocation6 + $0x34] sm:$0xf]
    %v71 = vld [vmem:[#allocation6 + $0x38] sm:$0xf]
    %v72 = vld [vmem:[#allocation6 + $0x3c] sm:$0xf]
    %v75 = vunpack.c.l.b16 %v55
    %v76 = vunpack.c.l.b16 %v56
    %v77 = vpack.c.b16 %v76, %v75
    %v95 = vunpack.c.l.b16 %v57
    %v96 = vunpack.c.l.b16 %v58
    %v97 = vunpack.c.l.b16 %v59
    %v98 = vunpack.c.l.b16 %v60
    %v99 = vunpack.c.l.b16 %v61
    %v100 = vunpack.c.l.b16 %v62
    %v101 = vunpack.c.l.b16 %v63
    %v102 = vunpack.c.l.b16 %v64
    %v103 = vunpack.c.l.b16 %v65
    %v104 = vunpack.c.l.b16 %v66
    %v105 = vunpack.c.l.b16 %v67
    %v106 = vunpack.c.l.b16 %v68
    %v107 = vunpack.c.l.b16 %v69
    %v108 = vunpack.c.l.b16 %v70
    %v109 = vunpack.c.l.b16 %v71
    %v110 = vunpack.c.l.b16 %v72
    %v111 = vpack.c.b16 %v96, %v95
    %v112 = vpack.c.b16 %v98, %v97
    %v113 = vpack.c.b16 %v100, %v99
    %v114 = vpack.c.b16 %v102, %v101
    %v115 = vpack.c.b16 %v104, %v103
    %v116 = vpack.c.b16 %v106, %v105
    %v117 = vpack.c.b16 %v108, %v107
    %v118 = vpack.c.b16 %v110, %v109
    %127 = vmatpush.bf16.msra.mxu0 %v118
    %128 = vmatpush.bf16.msra.mxu0 %v117
    %129 = vmatpush.bf16.msra.mxu0 %v116
    %130 = vmatpush.bf16.msra.mxu0 %v115
    %131 = vmatpush.bf16.msra.mxu0 %v114
    %132 = vmatpush.bf16.msra.mxu0 %v113
    %133 = vmatpush.bf16.msra.mxu0 %v112
    %134 = vmatpush.bf16.msra.mxu0 %v111
    %135 = vmatmul.bf16.gmra.mxu0 %v77
    %v136 = vpop.f32.mrf.mxu0
    %v137 = vadd.f32 0.0, %v136
    %v138 = vpop.f32.mrf.mxu0
    %v139 = vadd.f32 0.0, %v138
    %140 = vdwg.mxu0
    %v141 = vadd.f32 %v53, %v137
    %v142 = vadd.f32 %v54, %v139
    %143 = vst [vmem:[#allocation2] sm:$0xff] %v141
    %144 = vst [vmem:[#allocation2 + $0x8] sm:$0xff] %v142
    // Predicated region
    $region26: #{tpu_custom_call.1} parent=1 // pred_check
      %p145 = pneg %p47
    $region27: #{tpu_custom_call.1} parent=1 // pred_check_branch
      %147 = sbr.rel (%p145) target = $region29
    $region28: #{tpu_custom_call.1} parent=1 // pred_region
      %v148 = vld [vmem:[#allocation2] sm:$0xff]
      %v149 = vld [vmem:[#allocation2 + $0x8] sm:$0xff]
      %v150 = vld [vmem:[%s2] sm:$0x1]
      %v151 = vunpack.c.l.bf16 %v150
      %v152 = vperm.slane %v151, 0
      %v153 = vadd.f32 %v148, %v152
      %v154 = vadd.f32 %v149, %v152
      %v155 = vpack.c.bf16 %v153, %v153
      %v156 = vpack.c.bf16 %v154, %v154
      %157 = vst [vmem:[#allocation8] sm:$0xf] %v155
      %158 = vst [vmem:[#allocation8 + $0x4] sm:$0xf] %v156
    $region29: #{tpu_custom_call.1} parent=1 // pred_fallthru
      _
    // Predicated region
    $region30: #{tpu_custom_call.1} parent=1 // pred_check
      _
    $region31: #{tpu_custom_call.1} parent=1 // pred_check_branch
      %160 = sbr.rel (0) target = $region33
    $region32: #{tpu_custom_call.1} parent=1 // pred_region
      %162 = vsyncadd [#allocation5], 0
      %s163 = sshll.u32 [#allocation8], 4
      %s164 = int_to_ptr.vmem [resolvable:$true] %s163
      %s165 = sshll.u32 %s3, 4
      %s166 = int_to_ptr.hbm [resolvable:$true] %s165
      %171 = dma.vmem_to_hbm [thread:$0]  %s164, 128, %s166, [#allocation5], 64, 64, 4
    $region33: #{tpu_custom_call.1} parent=1 // pred_fallthru
      _
    // Predicated region
    $region34: #{tpu_custom_call.1} parent=1 // pred_check
      _
    $region35: #{tpu_custom_call.1} parent=1 // pred_check_branch
      %173 = sbr.rel (0) target = $region37
    $region36: #{tpu_custom_call.1} parent=1 // pred_region
      %175 = dma.done [#allocation5], 128
    $region37: #{tpu_custom_call.1} parent=1 // pred_fallthru
      _
    %176 = vsyncpa [#allocation4], 1
    %177 = vsyncpa [#allocation7], 1
    %178 = vsyncpa [#allocation5], 1

</llo_original>
